<compile_context>
chip_gen: v5e
topology: v5e:2x2
jax: 0.10.0
libtpu: 0.0.40
codegen_flags: <defaults>
</compile_context>

<pallas_src>
import jax
import jax.numpy as jnp
from jax.experimental import pallas as pl
from jax.experimental.pallas import tpu as pltpu


def _reservoir_reward_kernel(ns_ref, par_ref, out_ref):
    # ns_ref:  (sdim, tb)  feature-major tile (batch on lanes)
    # par_ref: (n_res, 4)  columns = [lower, upper, low_penalty, high_penalty]
    # out_ref: (1, tb)     lane-dense reward row
    n_res = par_ref.shape[0]
    rlevel = ns_ref[:n_res, :]              # static sublane slice: drop trailing time row
    lb = par_ref[:, 0:1]                    # (n_res, 1) -> broadcasts over lanes (batch)
    ub = par_ref[:, 1:2]
    lp = par_ref[:, 2:3]
    hp = par_ref[:, 3:4]

    # relu form: identical to the nested-where (each term is zero outside its branch).
    penalty = lp * jnp.maximum(lb - rlevel, 0.0) + hp * jnp.maximum(rlevel - ub, 0.0)
    out_ref[...] = jnp.sum(penalty, axis=0, keepdims=True)   # sublane reduce -> (1, tb)


def reservoir_reward(state, action, next_state, lower_bound, upper_bound,
                     low_penalty, high_penalty, *, tb=1024):
    """Computes ReservoirReward.forward(state, action, next_state).

    state / action are accepted for signature parity but (as in the PyTorch
    module) are unused by the reward computation.
    """
    del state, action  # unused, matches PyTorch semantics
    B, sdim = next_state.shape
    n_res = sdim - 1

    # Batch tile: lane-aligned (multiple of 128), capped so small batches use one step.
    tb = max(128, (min(tb, 2048) // 128) * 128)
    B_pad = pl.cdiv(B, tb) * tb
    if B_pad < tb:
        B_pad = tb

    # Feature-major layout: (sdim, B) so the batch maps to lanes (lane-dense IO).
    ns_t = jnp.asarray(next_state, jnp.float32).T
    if B_pad > B:
        ns_t = jnp.pad(ns_t, ((0, 0), (0, B_pad - B)))       # padded columns sliced off later

    # Pack the four per-reservoir parameter vectors into one (n_res, 4) constant.
    lb = jnp.broadcast_to(jnp.asarray(lower_bound, jnp.float32), (n_res,))
    ub = jnp.broadcast_to(jnp.asarray(upper_bound, jnp.float32), (n_res,))
    lp = jnp.broadcast_to(jnp.asarray(low_penalty, jnp.float32), (n_res,))
    hp = jnp.broadcast_to(jnp.asarray(high_penalty, jnp.float32), (n_res,))
    params = jnp.stack([lb, ub, lp, hp], axis=-1)             # (n_res, 4)

    grid = (B_pad // tb,)
    out = pl.pallas_call(
        _reservoir_reward_kernel,
        out_shape=jax.ShapeDtypeStruct((1, B_pad), jnp.float32),
        grid_spec=pltpu.PrefetchScalarGridSpec(
            num_scalar_prefetch=0,
            grid=grid,
            in_specs=[
                pl.BlockSpec((sdim, tb), lambda i: (0, i)),    # next_state^T tile
                pl.BlockSpec((n_res, 4), lambda i: (0, 0)),    # packed constants
            ],
            out_specs=pl.BlockSpec((1, tb), lambda i: (0, i)), # lane-dense output row
        ),
        compiler_params=pltpu.CompilerParams(
            dimension_semantics=("parallel",),
        ),
    )(ns_t, params)

    return out.reshape(B_pad)[:B]


def _reference(next_state, lb, ub, lp, hp):
    rlevel = next_state[..., :-1]
    penalty = jnp.where(
        (rlevel >= lb) & (rlevel <= ub),
        jnp.zeros_like(rlevel),
        jnp.where(rlevel < lb, lp * (lb - rlevel), hp * (rlevel - ub)),
    )
    return penalty.sum(axis=-1)


if __name__ == "__main__":
    # Synthetic deterministic config (shapes follow the Reservoir env: one
    # trailing time feature after the per-reservoir levels).
    n_reservoirs = 8
    state_dim = n_reservoirs + 1

    lower_bound = jnp.full((n_reservoirs,), 20.0, jnp.float32)
    upper_bound = jnp.full((n_reservoirs,), 80.0, jnp.float32)
    low_penalty = jnp.full((n_reservoirs,), -5.0, jnp.float32)
    high_penalty = jnp.full((n_reservoirs,), -100.0, jnp.float32)

    key = jax.random.PRNGKey(0)

    ok = True
    for batch in (64, 200):   # 200 exercises the cdiv + padding path
        k1, k2, k3, key = jax.random.split(key, 4)
        # Reservoir levels spread around / outside the [20, 80] band to hit all branches.
        state = jax.random.uniform(k1, (batch, state_dim), jnp.float32, 0.0, 100.0)
        action = jax.random.uniform(k2, (batch, n_reservoirs), jnp.float32, 0.0, 1.0)
        next_state = jax.random.uniform(k3, (batch, state_dim), jnp.float32, 0.0, 100.0)

        reward = reservoir_reward(state, action, next_state,
                                  lower_bound, upper_bound, low_penalty, high_penalty)
        reward = jax.block_until_ready(reward)

        expected = _reference(next_state, lower_bound, upper_bound,
                              low_penalty, high_penalty)
        assert reward.shape == (batch,)
        if not jnp.allclose(reward, expected, rtol=1e-6, atol=1e-4):
            ok = False
            print(f"mismatch at batch={batch}: {reward} vs {expected}")

    assert ok
    print("KERNEL_OK")
</pallas_src>

<mosaic_0001>
module attributes {stable_mosaic.version = 11 : i64} {
  func.func @_reservoir_reward_kernel(%arg0: i32, %arg1: memref<9x1024xf32, #tpu.memory_space<vmem>>, %arg2: memref<8x4xf32, #tpu.memory_space<vmem>>, %arg3: memref<1x1024xf32, #tpu.memory_space<vmem>>) attributes {dimension_semantics = [#tpu.dimension_semantics<parallel>], iteration_bounds = array<i64: 1>, scalar_prefetch = 0 : i64, scratch_operands = 0 : i64, tpu.core_type = #tpu.core_type<tc>, window_params = [{transform_indices = @transform_0, window_bounds = array<i64: 9, 1024>}, {pipeline_mode = #tpu.pipeline_mode<synchronous>, transform_indices = @transform_1, window_bounds = array<i64: 8, 4>}, {transform_indices = @transform_2, window_bounds = array<i64: 1, 1024>}]} {
    %c0 = arith.constant 0 : index
    %c0_0 = arith.constant 0 : index
    %0 = vector.load %arg1[%c0, %c0_0] : memref<9x1024xf32, #tpu.memory_space<vmem>>, vector<8x1024xf32>
    %c0_1 = arith.constant 0 : index
    %c0_2 = arith.constant 0 : index
    %1 = vector.load %arg2[%c0_1, %c0_2] : memref<8x4xf32, #tpu.memory_space<vmem>>, vector<8x1xf32>
    %c0_3 = arith.constant 0 : index
    %c1 = arith.constant 1 : index
    %2 = vector.load %arg2[%c0_3, %c1] : memref<8x4xf32, #tpu.memory_space<vmem>>, vector<8x1xf32>
    %c0_4 = arith.constant 0 : index
    %c2 = arith.constant 2 : index
    %3 = vector.load %arg2[%c0_4, %c2] : memref<8x4xf32, #tpu.memory_space<vmem>>, vector<8x1xf32>
    %c0_5 = arith.constant 0 : index
    %c3 = arith.constant 3 : index
    %4 = vector.load %arg2[%c0_5, %c3] : memref<8x4xf32, #tpu.memory_space<vmem>>, vector<8x1xf32>
    %5 = vector.broadcast %1 : vector<8x1xf32> to vector<8x1024xf32>
    %6 = arith.subf %5, %0 : vector<8x1024xf32>
    %cst = arith.constant 0.000000e+00 : f32
    %7 = vector.broadcast %cst : f32 to vector<8x1024xf32>
    %8 = arith.maximumf %6, %7 : vector<8x1024xf32>
    %9 = vector.broadcast %3 : vector<8x1xf32> to vector<8x1024xf32>
    %10 = arith.mulf %9, %8 : vector<8x1024xf32>
    %11 = vector.broadcast %2 : vector<8x1xf32> to vector<8x1024xf32>
    %12 = arith.subf %0, %11 : vector<8x1024xf32>
    %cst_6 = arith.constant 0.000000e+00 : f32
    %13 = vector.broadcast %cst_6 : f32 to vector<8x1024xf32>
    %14 = arith.maximumf %12, %13 : vector<8x1024xf32>
    %15 = vector.broadcast %4 : vector<8x1xf32> to vector<8x1024xf32>
    %16 = arith.mulf %15, %14 : vector<8x1024xf32>
    %17 = arith.addf %10, %16 : vector<8x1024xf32>
    %cst_7 = arith.constant dense<0.000000e+00> : vector<1024xf32>
    %18 = vector.multi_reduction <add>, %17, %cst_7 [0] : vector<8x1024xf32> to vector<1024xf32>
    %19 = vector.shape_cast %18 : vector<1024xf32> to vector<1x1024xf32>
    %c0_8 = arith.constant 0 : index
    %c0_9 = arith.constant 0 : index
    %20 = vector.load %arg3[%c0_8, %c0_9] : memref<1x1024xf32, #tpu.memory_space<vmem>>, vector<1x1024xf32>
    tpu.vector_store %arg3[%c0_8, %c0_9], %19 {strides = array<i32>} : memref<1x1024xf32, #tpu.memory_space<vmem>>, vector<1x1024xf32>,
    return
  }
  func.func @transform_0(%arg0: i32) -> (i32, i32) {
    %c0_i32 = arith.constant 0 : i32
    %c0_i32_0 = arith.constant 0 : i32
    return %c0_i32, %arg0 : i32, i32
  }
  func.func @transform_1(%arg0: i32) -> (i32, i32) {
    %c0_i32 = arith.constant 0 : i32
    %c0_i32_0 = arith.constant 0 : i32
    %c0_i32_1 = arith.constant 0 : i32
    return %c0_i32, %c0_i32_0 : i32, i32
  }
  func.func @transform_2(%arg0: i32) -> (i32, i32) {
    %c0_i32 = arith.constant 0 : i32
    %c0_i32_0 = arith.constant 0 : i32
    return %c0_i32, %arg0 : i32, i32
  }
}

</mosaic_0001>

<llo_original>
// kernel: tpu_custom_call.1
$region0: #{tpu_custom_call.1}
  #allocation0 [shape = 'u32[]', space=smem, size = 0x4, offset = 0x4, fixed_abs, tag = 'smem constant byte address 0x4 - core index']
  #allocation1 [shape = 'u32[72,128]{1,0:T(1,128)}', space=vmem, size = 0x9000, scoped, tag = 'internal scratch']
  %s0 = inlined_call_operand.hbm [shape: f32[9,1024], index: 0, kind: input, shape index: {}]
  %s1 = inlined_call_operand.vmem [shape: f32[8,4], index: 1, kind: input, shape index: {}]
  %s2 = inlined_call_operand.hbm [shape: f32[1,1024], index: 2, kind: output, shape index: {}]
  %s3 = sld [smem:[#allocation0]]
  $region22: #{tpu_custom_call.1} parent=0
    _
  %s5 = ssub.s32 1, %s3
  %s6 = scalar_select 0, %s5, %s3
  $region1: #{tpu_custom_call.1} parent=0
    #allocation2 [shape = 'u8[65536]{0}', space=vmem, size = 0x10000, scoped, tag = 'input window, operand 0, single buffered']
    #allocation3 [shape = 's32[1]{0}', space=sflag, size = 0x4, scoped, tag = 'scoped memory for tpu_custom_call.1']
    #allocation4 [shape = 's32[1]{0}', space=sflag, size = 0x4, scoped, tag = 'scoped memory for tpu_custom_call.1']
    #allocation5 [shape = 'u8[4096]{0}', space=vmem, size = 0x1000, scoped, tag = 'output window, operand 0, single buffered']
    %7 = vsyncpa [#allocation3], 0
    %8 = vsyncpa [#allocation4], 0
    // Predicated region
    $region2: #{tpu_custom_call.1} parent=1 // pred_check
      _
    $region3: #{tpu_custom_call.1} parent=1 // pred_check_branch
      %10 = sbr.rel (0) target = $region5
    $region4: #{tpu_custom_call.1} parent=1 // pred_region
      %12 = vsyncadd [#allocation3], 0
      %s13 = sshll.u32 %s0, 4
      %s14 = int_to_ptr.hbm [resolvable:$true] %s13
      %s15 = sshll.u32 [#allocation2], 4
      %s16 = int_to_ptr.vmem [resolvable:$true] %s15
      %21 = dma.hbm_to_vmem [thread:$0]  %s14, 2048, %s16, [#allocation3], 1024, 1024, 64
    $region5: #{tpu_custom_call.1} parent=1 // pred_fallthru
      _
    // Predicated region
    $region6: #{tpu_custom_call.1} parent=1 // pred_check
      _
    $region7: #{tpu_custom_call.1} parent=1 // pred_check_branch
      %23 = sbr.rel (0) target = $region9
    $region8: #{tpu_custom_call.1} parent=1 // pred_region
      _
    $region9: #{tpu_custom_call.1} parent=1 // pred_fallthru
      _
    // Predicated region
    $region10: #{tpu_custom_call.1} parent=1 // pred_check
      _
    $region11: #{tpu_custom_call.1} parent=1 // pred_check_branch
      %25 = sbr.rel (0) target = $region13
    $region12: #{tpu_custom_call.1} parent=1 // pred_region
      %27 = dma.done [#allocation3], 2048
    $region13: #{tpu_custom_call.1} parent=1 // pred_fallthru
      _
    %v28 = vld [vmem:[#allocation2] sm:$0xff]
    %v29 = vld [vmem:[#allocation2 + $0x8] sm:$0xff]
    %v30 = vld [vmem:[#allocation2 + $0x10] sm:$0xff]
    %v31 = vld [vmem:[#allocation2 + $0x18] sm:$0xff]
    %v32 = vld [vmem:[#allocation2 + $0x20] sm:$0xff]
    %v33 = vld [vmem:[#allocation2 + $0x28] sm:$0xff]
    %v34 = vld [vmem:[#allocation2 + $0x30] sm:$0xff]
    %v35 = vld [vmem:[#allocation2 + $0x38] sm:$0xff]
    %v36 = vld [vmem:[%s1] sm:$0xff]
    %38 = vset.pattern.permute.xlu0 0
    %39 = vperm.xlu0 %38, %v36
    %v40 = vpop.permute.xlu0 %39
    %v42 = vsub.f32 %v40, %v28
    %v43 = vsub.f32 %v40, %v29
    %v44 = vsub.f32 %v40, %v30
    %v45 = vsub.f32 %v40, %v31
    %v46 = vsub.f32 %v40, %v32
    %v47 = vsub.f32 %v40, %v33
    %v48 = vsub.f32 %v40, %v34
    %v49 = vsub.f32 %v40, %v35
    %v50 = vmax.f32 %v42, 0.0
    %v51 = vmax.f32 %v43, 0.0
    %v52 = vmax.f32 %v44, 0.0
    %v53 = vmax.f32 %v45, 0.0
    %v54 = vmax.f32 %v46, 0.0
    %v55 = vmax.f32 %v47, 0.0
    %v56 = vmax.f32 %v48, 0.0
    %v57 = vmax.f32 %v49, 0.0
    %58 = vset.pattern.permute.xlu0 2
    %59 = vperm.xlu0 %58, %v36
    %v60 = vpop.permute.xlu0 %59
    %v62 = vmul.f32 %v60, %v50
    %v63 = vmul.f32 %v60, %v51
    %v64 = vmul.f32 %v60, %v52
    %v65 = vmul.f32 %v60, %v53
    %v66 = vmul.f32 %v60, %v54
    %v67 = vmul.f32 %v60, %v55
    %v68 = vmul.f32 %v60, %v56
    %v69 = vmul.f32 %v60, %v57
    %70 = vset.pattern.permute.xlu0 1
    %71 = vperm.xlu0 %70, %v36
    %v72 = vpop.permute.xlu0 %71
    %v74 = vsub.f32 %v28, %v72
    %v75 = vsub.f32 %v29, %v72
    %v76 = vsub.f32 %v30, %v72
    %v77 = vsub.f32 %v31, %v72
    %v78 = vsub.f32 %v32, %v72
    %v79 = vsub.f32 %v33, %v72
    %v80 = vsub.f32 %v34, %v72
    %v81 = vsub.f32 %v35, %v72
    %v82 = vmax.f32 %v74, 0.0
    %v83 = vmax.f32 %v75, 0.0
    %v84 = vmax.f32 %v76, 0.0
    %v85 = vmax.f32 %v77, 0.0
    %v86 = vmax.f32 %v78, 0.0
    %v87 = vmax.f32 %v79, 0.0
    %v88 = vmax.f32 %v80, 0.0
    %v89 = vmax.f32 %v81, 0.0
    %90 = vset.pattern.permute.xlu0 3
    %91 = vperm.xlu0 %90, %v36
    %v92 = vpop.permute.xlu0 %91
    %v94 = vmul.f32 %v92, %v82
    %v95 = vmul.f32 %v92, %v83
    %v96 = vmul.f32 %v92, %v84
    %v97 = vmul.f32 %v92, %v85
    %v98 = vmul.f32 %v92, %v86
    %v99 = vmul.f32 %v92, %v87
    %v100 = vmul.f32 %v92, %v88
    %v101 = vmul.f32 %v92, %v89
    %v102 = vadd.f32 %v62, %v94
    %v103 = vadd.f32 %v63, %v95
    %v104 = vadd.f32 %v64, %v96
    %v105 = vadd.f32 %v65, %v97
    %v106 = vadd.f32 %v66, %v98
    %v107 = vadd.f32 %v67, %v99
    %v108 = vadd.f32 %v68, %v100
    %v109 = vadd.f32 %v69, %v101
    %v110 = vrot.slane %v102, 4
    %v111 = vadd.f32 %v102, %v110
    %v112 = vrot.slane %v111, 2
    %v113 = vadd.f32 %v111, %v112
    %v114 = vrot.slane %v113, 1
    %v115 = vadd.f32 %v113, %v114
    %v116 = vrot.slane %v103, 4
    %v117 = vadd.f32 %v103, %v116
    %v118 = vrot.slane %v117, 2
    %v119 = vadd.f32 %v117, %v118
    %v120 = vrot.slane %v119, 1
    %v121 = vadd.f32 %v119, %v120
    %v122 = vrot.slane %v104, 4
    %v123 = vadd.f32 %v104, %v122
    %v124 = vrot.slane %v123, 2
    %v125 = vadd.f32 %v123, %v124
    %v126 = vrot.slane %v125, 1
    %v127 = vadd.f32 %v125, %v126
    %v128 = vrot.slane %v105, 4
    %v129 = vadd.f32 %v105, %v128
    %v130 = vrot.slane %v129, 2
    %v131 = vadd.f32 %v129, %v130
    %v132 = vrot.slane %v131, 1
    %v133 = vadd.f32 %v131, %v132
    %v134 = vrot.slane %v106, 4
    %v135 = vadd.f32 %v106, %v134
    %v136 = vrot.slane %v135, 2
    %v137 = vadd.f32 %v135, %v136
    %v138 = vrot.slane %v137, 1
    %v139 = vadd.f32 %v137, %v138
    %v140 = vrot.slane %v107, 4
    %v141 = vadd.f32 %v107, %v140
    %v142 = vrot.slane %v141, 2
    %v143 = vadd.f32 %v141, %v142
    %v144 = vrot.slane %v143, 1
    %v145 = vadd.f32 %v143, %v144
    %v146 = vrot.slane %v108, 4
    %v147 = vadd.f32 %v108, %v146
    %v148 = vrot.slane %v147, 2
    %v149 = vadd.f32 %v147, %v148
    %v150 = vrot.slane %v149, 1
    %v151 = vadd.f32 %v149, %v150
    %v152 = vrot.slane %v109, 4
    %v153 = vadd.f32 %v109, %v152
    %v154 = vrot.slane %v153, 2
    %v155 = vadd.f32 %v153, %v154
    %v156 = vrot.slane %v155, 1
    %v157 = vadd.f32 %v155, %v156
    %v166 = vrot.slane %v121, 7
    %v167 = vrot.slane %v127, 6
    %v168 = vrot.slane %v133, 5
    %v169 = vrot.slane %v139, 4
    %v170 = vrot.slane %v145, 3
    %v171 = vrot.slane %v151, 2
    %v172 = vrot.slane %v157, 1
    %vm173 = vcmask 1040384
    %v174 = vsel %vm173, %v115, %v166
    %vm175 = vcmask 1042434
    %v176 = vsel %vm175, %v167, %v168
    %vm177 = vcmask 1041408
    %v178 = vsel %vm177, %v174, %v176
    %vm179 = vcmask 1044484
    %v180 = vsel %vm179, %v169, %v170
    %vm181 = vcmask 1046534
    %v182 = vsel %vm181, %v171, %v172
    %vm183 = vcmask 1045508
    %v184 = vsel %vm183, %v180, %v182
    %vm185 = vcmask 1043456
    %v186 = vsel %vm185, %v178, %v184
    %188 = vst [vmem:[#allocation5] sm:$0xff] %v186
    // Predicated region
    $region14: #{tpu_custom_call.1} parent=1 // pred_check
      _
    $region15: #{tpu_custom_call.1} parent=1 // pred_check_branch
      %190 = sbr.rel (0) target = $region17
    $region16: #{tpu_custom_call.1} parent=1 // pred_region
      %192 = vsyncadd [#allocation4], 0
      %s194 = sshll.u32 [#allocation5], 4
      %s195 = int_to_ptr.vmem [resolvable:$true] %s194
      %s196 = sshll.u32 %s2, 4
      %s197 = int_to_ptr.hbm [resolvable:$true] %s196
      %199 = dma.vmem_to_hbm [thread:$0]  %s195, 128, %s197, [#allocation4]
    $region17: #{tpu_custom_call.1} parent=1 // pred_fallthru
      _
    // Predicated region
    $region18: #{tpu_custom_call.1} parent=1 // pred_check
      _
    $region19: #{tpu_custom_call.1} parent=1 // pred_check_branch
      %201 = sbr.rel (0) target = $region21
    $region20: #{tpu_custom_call.1} parent=1 // pred_region
      %203 = dma.done [#allocation4], 128
    $region21: #{tpu_custom_call.1} parent=1 // pred_fallthru
      _
    %204 = vsyncpa [#allocation3], 1
    %205 = vsyncpa [#allocation4], 1

</llo_original>
